<compile_context>
chip_gen: v5e
topology: v5e:2x2
jax: 0.10.0
libtpu: 0.0.40
codegen_flags: <defaults>
</compile_context>

<pallas_src>
import functools

import jax
import jax.numpy as jnp
from jax.experimental import pallas as pl
from jax.experimental.pallas import tpu as pltpu

_LANE = 128          # lane width (last dim)
_BTILE_ALIGN = 16    # bf16 sublane packing (batch-tile alignment)


def _round_up(x, m):
    return ((x + m - 1) // m) * m


def _apply_activation(x, activation):
    if activation == "relu":
        return jnp.maximum(x, 0.0)
    if activation == "tanh":
        return jnp.tanh(x)
    if activation == "swish":
        return x * jax.nn.sigmoid(x)
    raise NotImplementedError(f"Unknown activation {activation}")


def _device_kind():
    try:
        return jax.devices()[0].device_kind.lower()
    except Exception:
        return ""


def _vmem_capacity_bytes():
    """Physical per-core VMEM, generation-aware with a safe fallback."""
    try:
        return int(pltpu.get_tpu_info().vmem_capacity_bytes)
    except Exception:
        kind = _device_kind()
        return (64 << 20) if "v7" in kind else (128 << 20)


def _use_bf16_elementwise():
    """bf16 VPU/EUP exists on v6e/v7x; v5e (and older) keep f32 elementwise."""
    kind = _device_kind()
    return ("v6" in kind) or ("v7" in kind)


# ----------------------------------------------------------------------------
# Kernel: one batch tile of the full MLP forward.
# ----------------------------------------------------------------------------
def actor_mlp_kernel(x_ref, w_ref, b_ref, o_ref, *, layer_dims, col_offsets,
                     activation, bf16_elementwise):
    """x_ref : (TB, d_state)       f32 state tile (unpadded features)
       w_ref : (max_rows, sum_out) bf16, all layer weights packed column-wise
       b_ref : (1, sum_out)        f32, all layer biases packed the same way
       o_ref : (TB, pout_last)     f32 output tile (lane-dense, padded)

       layer_dims[i] = (K_i, pout_i): contraction dim and padded out dim.
    """
    n_linear = len(layer_dims)
    h = x_ref[...].astype(jnp.bfloat16)                 # bf16 into the MXU
    acc = None
    for i, (k, pout) in enumerate(layer_dims):
        off = col_offsets[i]
        w = w_ref[0:k, off:off + pout]                  # bf16 (K_i, pout_i), static slice
        b = b_ref[0:1, off:off + pout]                  # f32  (1, pout_i)
        acc = jnp.dot(h, w, preferred_element_type=jnp.float32) + b
        if i < n_linear - 1:
            if bf16_elementwise:
                # v6e/v7x: elementwise in bf16 (relu bit-identical; tanh/swish
                # error below the already-accepted bf16-matmul error).
                h = _apply_activation(acc.astype(jnp.bfloat16), activation)
            else:
                # v5e: no bf16 VPU/EUP — activate in f32, then cast.
                h = _apply_activation(acc, activation).astype(jnp.bfloat16)
    # Final torch.tanh from Actor.forward, stored lane-dense in f32.
    o_ref[...] = jnp.tanh(acc).astype(o_ref.dtype)


# ----------------------------------------------------------------------------
# Wrapper
# ----------------------------------------------------------------------------
def actor_forward(state, params, activation="relu", batch_tile=1024):
    """state: (B, d_state) f32.  params: list of (W, b) with W shaped (in, out)."""
    B, d_state = state.shape
    d_action = params[-1][0].shape[1]

    in_dims = [W.shape[0] for W, _ in params]
    out_dims = [W.shape[1] for W, _ in params]
    pout = [_round_up(d, _LANE) for d in out_dims]      # lane-dense layer widths
    # Contraction dim per layer: raw d_state for layer 0 (input is unpadded),
    # the padded previous-layer width afterwards.
    k_dims = [d_state] + pout[:-1]
    max_rows = max(k_dims)

    col_off, off = [], 0
    for po in pout:
        col_off.append(off)
        off += po
    sum_out = off

    # Pack all weights into one bf16 slab and all biases into one f32 slab.
    # Zero padding keeps the math exact: padded h columns are zero, padded
    # weight rows/columns and bias entries are zero, and relu/tanh/swish all
    # map 0 -> 0.
    w_slab = jnp.zeros((max_rows, sum_out), jnp.float32)
    b_slab = jnp.zeros((1, sum_out), jnp.float32)
    for i, (W, b) in enumerate(params):
        w_slab = w_slab.at[:in_dims[i], col_off[i]:col_off[i] + out_dims[i]].set(W)
        b_slab = b_slab.at[0, col_off[i]:col_off[i] + out_dims[i]].set(b)
    w_slab = w_slab.astype(jnp.bfloat16)

    # Batch tiling: 16-aligned tiles (bf16 sublane packing); validate/round a
    # user-supplied batch_tile so (8,128) lowering constraints always hold.
    batch_tile = max(_BTILE_ALIGN, _round_up(int(batch_tile), _BTILE_ALIGN))
    TB = min(_round_up(B, _BTILE_ALIGN), batch_tile)
    if B > 256 and _round_up(B, TB) // TB < 2:
        # Split large single-tile batches into >= 2 grid steps so both of
        # v7x's TensorCores get work (harmless elsewhere).
        TB = _round_up((B + 1) // 2, _BTILE_ALIGN)
    B_pad = _round_up(B, TB)
    n_tiles = B_pad // TB

    # Input: pad the batch dim only (features stay raw f32, cast in-kernel).
    state = state.astype(jnp.float32)
    if B_pad == B:
        x = state
    else:
        x = jnp.zeros((B_pad, d_state), jnp.float32).at[:B].set(state)

    pout_last = pout[-1]
    max_pout = max(pout)

    # Explicit VMEM budget: single-buffered resident slabs, double-buffered
    # I/O tiles, one live f32 accumulator + bf16 activation per layer step,
    # 25% headroom, clamped to (physical capacity - 16 MiB) for this chip.
    need = (
        max_rows * sum_out * 2            # bf16 weight slab (Buffered(1))
        + sum_out * 4                     # f32 bias slab    (Buffered(1))
        + 2 * TB * d_state * 4            # f32 input tile, double-buffered
        + 2 * TB * pout_last * 4          # f32 output tile, double-buffered
        + 2 * 4 * TB * max_pout           # live accumulator / activation scratch
    )
    cap = _vmem_capacity_bytes()
    vmem_limit = int(max(4 << 20, min(int(need * 1.25), cap - (16 << 20))))

    kernel = functools.partial(
        actor_mlp_kernel,
        layer_dims=tuple(zip(k_dims, pout)),
        col_offsets=tuple(col_off),
        activation=activation,
        bf16_elementwise=_use_bf16_elementwise(),
    )

    out_padded = pl.pallas_call(
        kernel,
        out_shape=jax.ShapeDtypeStruct((B_pad, pout_last), jnp.float32),
        grid=(n_tiles,),
        in_specs=[
            # Per-tile state: last dim equals the full array dim -> legal block.
            pl.BlockSpec((TB, d_state), lambda i: (i, 0)),
            # Grid-invariant slabs: keep resident, do NOT double-buffer.
            pl.BlockSpec((max_rows, sum_out), lambda i: (0, 0),
                         pipeline_mode=pl.Buffered(buffer_count=1)),
            pl.BlockSpec((1, sum_out), lambda i: (0, 0),
                         pipeline_mode=pl.Buffered(buffer_count=1)),
        ],
        out_specs=pl.BlockSpec((TB, pout_last), lambda i: (i, 0)),
        compiler_params=pltpu.CompilerParams(
            dimension_semantics=("parallel",),
            vmem_limit_bytes=vmem_limit,
        ),
    )(x, w_slab, b_slab)

    # TODO(synk): for tiny B the call is launch/weight-DMA bound; a cross-call
    # weight-slab prefetch (P10) or multi-step batching would be the next lever.
    return out_padded[:B, :d_action]


# ----------------------------------------------------------------------------
# Deterministic parameter init (Xavier-uniform weights, zero bias),
# mirroring Actor.init_weights.
# ----------------------------------------------------------------------------
def init_actor_params(key, d_state, d_action, n_units, n_layers):
    dims = [d_state] + [n_units] * n_layers + [d_action]
    params = []
    for i in range(len(dims) - 1):
        fan_in, fan_out = dims[i], dims[i + 1]
        key, sub = jax.random.split(key)
        limit = (6.0 / (fan_in + fan_out)) ** 0.5
        W = jax.random.uniform(
            sub, (fan_in, fan_out), jnp.float32, minval=-limit, maxval=limit
        )
        b = jnp.zeros((fan_out,), jnp.float32)
        params.append((W, b))
    return params


# Pure-JAX references for correctness checking.
def actor_forward_ref_f32(state, params, activation="relu"):
    h = state
    for i, (W, b) in enumerate(params):
        h = h @ W + b
        if i < len(params) - 1:
            h = _apply_activation(h, activation)
    return jnp.tanh(h)


def actor_forward_ref_matched(state, params, activation="relu",
                              bf16_elementwise=False):
    # Mirrors the kernel's numerics: bf16 matmul inputs, f32 accumulation,
    # activation dtype matching the chip path, bf16 re-cast between layers.
    h = state.astype(jnp.bfloat16)
    acc = None
    for i, (W, b) in enumerate(params):
        acc = jnp.dot(h, W.astype(jnp.bfloat16),
                      preferred_element_type=jnp.float32) + b
        if i < len(params) - 1:
            if bf16_elementwise:
                h = _apply_activation(acc.astype(jnp.bfloat16), activation)
            else:
                h = _apply_activation(acc, activation).astype(jnp.bfloat16)
    return jnp.tanh(acc)


if __name__ == "__main__":
    # Small shapes implied by the module: MLP on a flat state vector.
    B, d_state, n_units, d_action, n_layers = 8, 32, 64, 8, 2
    activation = "relu"

    key = jax.random.PRNGKey(0)
    key, pkey, skey = jax.random.split(key, 3)

    params = init_actor_params(pkey, d_state, d_action, n_units, n_layers)
    state = jax.random.normal(skey, (B, d_state), jnp.float32)

    out = actor_forward(state, params, activation=activation)
    out = jax.block_until_ready(out)
    assert out.shape == (B, d_action)

    # Tight check against the numerics-matched (bf16-matmul) reference.
    ref_matched = actor_forward_ref_matched(
        state, params, activation=activation,
        bf16_elementwise=_use_bf16_elementwise())
    err_matched = jnp.max(jnp.abs(out - ref_matched))
    assert jnp.allclose(out, ref_matched, atol=1e-4, rtol=1e-4), (
        f"max err vs numerics-matched ref {err_matched}"
    )

    # Loose sanity check against the full-f32 reference (bf16 rounding only).
    ref_f32 = actor_forward_ref_f32(state, params, activation=activation)
    err_f32 = jnp.max(jnp.abs(out - ref_f32))
    assert jnp.allclose(out, ref_f32, atol=5e-2, rtol=5e-2), (
        f"max err vs f32 ref {err_f32}"
    )

    print("KERNEL_OK")
</pallas_src>

<mosaic_0001>
module attributes {stable_mosaic.version = 11 : i64} {
  func.func @actor_mlp_kernel(%arg0: i32, %arg1: memref<16x32xf32, #tpu.memory_space<vmem>>, %arg2: memref<128x384xbf16, #tpu.memory_space<vmem>>, %arg3: memref<1x384xf32, #tpu.memory_space<vmem>>, %arg4: memref<16x128xf32, #tpu.memory_space<vmem>>) attributes {dimension_semantics = [#tpu.dimension_semantics<parallel>], iteration_bounds = array<i64: 1>, scalar_prefetch = 0 : i64, scratch_operands = 0 : i64, tpu.core_type = #tpu.core_type<tc>, window_params = [{transform_indices = @transform_0, window_bounds = array<i64: 16, 32>}, {pipeline_mode = #tpu.pipeline_mode<synchronous>, transform_indices = @transform_1, window_bounds = array<i64: 128, 384>}, {pipeline_mode = #tpu.pipeline_mode<synchronous>, transform_indices = @transform_2, window_bounds = array<i64: 1, 384>}, {transform_indices = @transform_3, window_bounds = array<i64: 16, 128>}]} {
    %c0 = arith.constant 0 : index
    %c0_0 = arith.constant 0 : index
    %0 = vector.load %arg1[%c0, %c0_0] : memref<16x32xf32, #tpu.memory_space<vmem>>, vector<16x32xf32>
    %1 = arith.truncf %0 : vector<16x32xf32> to vector<16x32xbf16>
    %c0_1 = arith.constant 0 : index
    %c0_2 = arith.constant 0 : index
    %2 = vector.load %arg2[%c0_1, %c0_2] : memref<128x384xbf16, #tpu.memory_space<vmem>>, vector<32x128xbf16>
    %c0_3 = arith.constant 0 : index
    %c0_4 = arith.constant 0 : index
    %3 = vector.load %arg3[%c0_3, %c0_4] : memref<1x384xf32, #tpu.memory_space<vmem>>, vector<1x128xf32>
    %cst = arith.constant dense<0.000000e+00> : vector<16x128xf32>
    %4 = tpu.matmul %1, %2, %cst {dimension_numbers = #tpu.dot_dimension_numbers<[1], [0], [0], [1], [0, 0, 1, 1], [], []>} : vector<16x32xbf16>, vector<32x128xbf16>, vector<16x128xf32> -> vector<16x128xf32>
    %5 = vector.broadcast %3 : vector<1x128xf32> to vector<16x128xf32>
    %6 = arith.addf %4, %5 : vector<16x128xf32>
    %cst_5 = arith.constant 0.000000e+00 : f32
    %7 = vector.broadcast %cst_5 : f32 to vector<16x128xf32>
    %8 = arith.maximumf %6, %7 : vector<16x128xf32>
    %9 = arith.truncf %8 : vector<16x128xf32> to vector<16x128xbf16>
    %c0_6 = arith.constant 0 : index
    %c128 = arith.constant 128 : index
    %10 = vector.load %arg2[%c0_6, %c128] : memref<128x384xbf16, #tpu.memory_space<vmem>>, vector<128x128xbf16>
    %c0_7 = arith.constant 0 : index
    %c128_8 = arith.constant 128 : index
    %11 = vector.load %arg3[%c0_7, %c128_8] : memref<1x384xf32, #tpu.memory_space<vmem>>, vector<1x128xf32>
    %cst_9 = arith.constant dense<0.000000e+00> : vector<16x128xf32>
    %12 = tpu.matmul %9, %10, %cst_9 {dimension_numbers = #tpu.dot_dimension_numbers<[1], [0], [0], [1], [0, 0, 1, 1], [], []>} : vector<16x128xbf16>, vector<128x128xbf16>, vector<16x128xf32> -> vector<16x128xf32>
    %13 = vector.broadcast %11 : vector<1x128xf32> to vector<16x128xf32>
    %14 = arith.addf %12, %13 : vector<16x128xf32>
    %cst_10 = arith.constant 0.000000e+00 : f32
    %15 = vector.broadcast %cst_10 : f32 to vector<16x128xf32>
    %16 = arith.maximumf %14, %15 : vector<16x128xf32>
    %17 = arith.truncf %16 : vector<16x128xf32> to vector<16x128xbf16>
    %c0_11 = arith.constant 0 : index
    %c256 = arith.constant 256 : index
    %18 = vector.load %arg2[%c0_11, %c256] : memref<128x384xbf16, #tpu.memory_space<vmem>>, vector<128x128xbf16>
    %c0_12 = arith.constant 0 : index
    %c256_13 = arith.constant 256 : index
    %19 = vector.load %arg3[%c0_12, %c256_13] : memref<1x384xf32, #tpu.memory_space<vmem>>, vector<1x128xf32>
    %cst_14 = arith.constant dense<0.000000e+00> : vector<16x128xf32>
    %20 = tpu.matmul %17, %18, %cst_14 {dimension_numbers = #tpu.dot_dimension_numbers<[1], [0], [0], [1], [0, 0, 1, 1], [], []>} : vector<16x128xbf16>, vector<128x128xbf16>, vector<16x128xf32> -> vector<16x128xf32>
    %21 = vector.broadcast %19 : vector<1x128xf32> to vector<16x128xf32>
    %22 = arith.addf %20, %21 : vector<16x128xf32>
    %23 = math.tanh %22 : vector<16x128xf32>
    %c0_15 = arith.constant 0 : index
    %c0_16 = arith.constant 0 : index
    %24 = vector.load %arg4[%c0_15, %c0_16] : memref<16x128xf32, #tpu.memory_space<vmem>>, vector<16x128xf32>
    tpu.vector_store %arg4[%c0_15, %c0_16], %23 {strides = array<i32>} : memref<16x128xf32, #tpu.memory_space<vmem>>, vector<16x128xf32>,
    return
  }
  func.func @transform_0(%arg0: i32) -> (i32, i32) {
    %c0_i32 = arith.constant 0 : i32
    %c0_i32_0 = arith.constant 0 : i32
    return %arg0, %c0_i32 : i32, i32
  }
  func.func @transform_1(%arg0: i32) -> (i32, i32) {
    %c0_i32 = arith.constant 0 : i32
    %c0_i32_0 = arith.constant 0 : i32
    %c0_i32_1 = arith.constant 0 : i32
    return %c0_i32, %c0_i32_0 : i32, i32
  }
  func.func @transform_2(%arg0: i32) -> (i32, i32) {
    %c0_i32 = arith.constant 0 : i32
    %c0_i32_0 = arith.constant 0 : i32
    %c0_i32_1 = arith.constant 0 : i32
    return %c0_i32, %c0_i32_0 : i32, i32
  }
  func.func @transform_3(%arg0: i32) -> (i32, i32) {
    %c0_i32 = arith.constant 0 : i32
    %c0_i32_0 = arith.constant 0 : i32
    return %arg0, %c0_i32 : i32, i32
  }
}

</mosaic_0001>

<llo_original>
// kernel: tpu_custom_call.1
$region0: #{tpu_custom_call.1}
  #allocation0 [shape = 'u32[]', space=smem, size = 0x4, offset = 0x4, fixed_abs, tag = 'smem constant byte address 0x4 - core index']
  #allocation1 [shape = 'u32[72,128]{1,0:T(1,128)}', space=vmem, size = 0x9000, scoped, tag = 'internal scratch']
  %s0 = inlined_call_operand.hbm [shape: f32[16,32], index: 0, kind: input, shape index: {}]
  %s1 = inlined_call_operand.hbm [shape: bf16[128,384], index: 1, kind: input, shape index: {}]
  %s2 = inlined_call_operand.hbm [shape: f32[1,384], index: 2, kind: input, shape index: {}]
  %s3 = inlined_call_operand.hbm [shape: f32[16,128], index: 3, kind: output, shape index: {}]
  %s4 = sld [smem:[#allocation0]]
  $region34: #{tpu_custom_call.1} parent=0
    _
  %s6 = ssub.s32 1, %s4
  %s7 = scalar_select 0, %s6, %s4
  $region1: #{tpu_custom_call.1} parent=0
    #allocation2 [shape = 'u8[8192]{0}', space=vmem, size = 0x2000, scoped, tag = 'input window, operand 0, single buffered']
    #allocation3 [shape = 's32[1]{0}', space=sflag, size = 0x4, scoped, tag = 'scoped memory for tpu_custom_call.1']
    #allocation4 [shape = 's32[1]{0}', space=sflag, size = 0x4, scoped, tag = 'scoped memory for tpu_custom_call.1']
    #allocation5 [shape = 'u8[98304]{0}', space=vmem, size = 0x18000, scoped, tag = 'input window, operand 1, single buffered']
    #allocation6 [shape = 's32[1]{0}', space=sflag, size = 0x4, scoped, tag = 'scoped memory for tpu_custom_call.1']
    #allocation7 [shape = 'u8[1536]{0}', space=vmem, size = 0x800, scoped, tag = 'input window, operand 2, single buffered']
    #allocation8 [shape = 'u8[8192]{0}', space=vmem, size = 0x2000, scoped, tag = 'output window, operand 0, single buffered']
    %8 = vsyncpa [#allocation3], 0
    %9 = vsyncpa [#allocation6], 0
    %10 = vsyncpa [#allocation4], 0
    // Predicated region
    $region2: #{tpu_custom_call.1} parent=1 // pred_check
      _
    $region3: #{tpu_custom_call.1} parent=1 // pred_check_branch
      %12 = sbr.rel (0) target = $region5
    $region4: #{tpu_custom_call.1} parent=1 // pred_region
      %14 = vsyncadd [#allocation3], 0
      %s15 = sshll.u32 %s0, 4
      %s16 = int_to_ptr.hbm [resolvable:$true] %s15
      %s17 = sshll.u32 [#allocation2], 4
      %s18 = int_to_ptr.vmem [resolvable:$true] %s17
      %23 = dma.hbm_to_vmem [thread:$0]  %s16, 256, %s18, [#allocation3], 128, 128, 8
    $region5: #{tpu_custom_call.1} parent=1 // pred_fallthru
      _
    // Predicated region
    $region6: #{tpu_custom_call.1} parent=1 // pred_check
      _
    $region7: #{tpu_custom_call.1} parent=1 // pred_check_branch
      %25 = sbr.rel (0) target = $region9
    $region8: #{tpu_custom_call.1} parent=1 // pred_region
      %27 = vsyncadd [#allocation6], 0
      %s28 = sshll.u32 %s1, 4
      %s29 = int_to_ptr.hbm [resolvable:$true] %s28
      %s30 = sshll.u32 [#allocation5], 4
      %s31 = int_to_ptr.vmem [resolvable:$true] %s30
      %36 = dma.hbm_to_vmem [thread:$0]  %s29, 3072, %s31, [#allocation6], 192, 192, 12
    $region9: #{tpu_custom_call.1} parent=1 // pred_fallthru
      _
    // Predicated region
    $region10: #{tpu_custom_call.1} parent=1 // pred_check
      _
    $region11: #{tpu_custom_call.1} parent=1 // pred_check_branch
      %38 = sbr.rel (0) target = $region13
    $region12: #{tpu_custom_call.1} parent=1 // pred_region
      %40 = vsyncadd [#allocation6], 0
      %s42 = sshll.u32 %s2, 4
      %s43 = int_to_ptr.hbm [resolvable:$true] %s42
      %s44 = sshll.u32 [#allocation7], 4
      %s45 = int_to_ptr.vmem [resolvable:$true] %s44
      %47 = dma.hbm_to_vmem [thread:$0]  %s43, 48, %s45, [#allocation6]
    $region13: #{tpu_custom_call.1} parent=1 // pred_fallthru
      _
    // Predicated region
    $region14: #{tpu_custom_call.1} parent=1 // pred_check
      _
    $region15: #{tpu_custom_call.1} parent=1 // pred_check_branch
      %49 = sbr.rel (0) target = $region17
    $region16: #{tpu_custom_call.1} parent=1 // pred_region
      %51 = dma.done [#allocation3], 256
    $region17: #{tpu_custom_call.1} parent=1 // pred_fallthru
      _
    // Predicated region
    $region18: #{tpu_custom_call.1} parent=1 // pred_check
      _
    $region19: #{tpu_custom_call.1} parent=1 // pred_check_branch
      %53 = sbr.rel (0) target = $region21
    $region20: #{tpu_custom_call.1} parent=1 // pred_region
      %55 = dma.done [#allocation6], 3072
    $region21: #{tpu_custom_call.1} parent=1 // pred_fallthru
      _
    // Predicated region
    $region22: #{tpu_custom_call.1} parent=1 // pred_check
      _
    $region23: #{tpu_custom_call.1} parent=1 // pred_check_branch
      %57 = sbr.rel (0) target = $region25
    $region24: #{tpu_custom_call.1} parent=1 // pred_region
      %59 = dma.done [#allocation6], 48
    $region25: #{tpu_custom_call.1} parent=1 // pred_fallthru
      _
    %v61 = vld [vmem:[#allocation2] sm:$0xff]
    %v62 = vld [vmem:[#allocation2 + $0x8] sm:$0xff]
    %v63 = vpack.c.bf16 %v62, %v61
    %v64 = vld [vmem:[#allocation5] sm:$0xf]
    %v65 = vld [vmem:[#allocation5 + $0xc] sm:$0xf]
    %v66 = vld [vmem:[#allocation5 + $0x18] sm:$0xf]
    %v67 = vld [vmem:[#allocation5 + $0x24] sm:$0xf]
    %v68 = vld [vmem:[#allocation7] sm:$0x1]
    %v70 = vperm.slane %v68, 0
    %v76 = vunpack.c.l.b16 %v64
    %v77 = vunpack.c.l.b16 %v65
    %v78 = vunpack.c.l.b16 %v66
    %v79 = vunpack.c.l.b16 %v67
    %v80 = vpack.c.b16 %v77, %v76
    %v81 = vpack.c.b16 %v79, %v78
    %vm84 = vcmask 261120
    %v86 = vsel %vm84, %v63, 0
    %88 = vmatpush.bf16.msra.mxu0 0
    %89 = vmatpush.bf16.msra.mxu0 0
    %90 = vmatpush.bf16.msra.mxu0 0
    %91 = vmatpush.bf16.msra.mxu0 0
    %92 = vmatpush.bf16.msra.mxu0 0
    %93 = vmatpush.bf16.msra.mxu0 0
    %94 = vmatpush.bf16.msra.mxu0 %v81
    %95 = vmatpush.bf16.msra.mxu0 %v80
    %96 = vmatmul.bf16.gmra.mxu0 %v86
    %v97 = vpop.f32.mrf.mxu0
    %v98 = vadd.f32 %v70, %v97
    %v99 = vpop.f32.mrf.mxu0
    %v100 = vadd.f32 %v70, %v99
    %101 = vdwg.mxu0
    %v102 = vmax.f32 %v98, 0.0
    %v103 = vmax.f32 %v100, 0.0
    %v104 = vpack.c.bf16 %v103, %v102
    %v105 = vld [vmem:[#allocation5 + $0x4] sm:$0xf]
    %v106 = vld [vmem:[#allocation5 + $0x10] sm:$0xf]
    %v107 = vld [vmem:[#allocation5 + $0x1c] sm:$0xf]
    %v108 = vld [vmem:[#allocation5 + $0x28] sm:$0xf]
    %v109 = vld [vmem:[#allocation5 + $0x34] sm:$0xf]
    %v110 = vld [vmem:[#allocation5 + $0x40] sm:$0xf]
    %v111 = vld [vmem:[#allocation5 + $0x4c] sm:$0xf]
    %v112 = vld [vmem:[#allocation5 + $0x58] sm:$0xf]
    %v113 = vld [vmem:[#allocation5 + $0x64] sm:$0xf]
    %v114 = vld [vmem:[#allocation5 + $0x70] sm:$0xf]
    %v115 = vld [vmem:[#allocation5 + $0x7c] sm:$0xf]
    %v116 = vld [vmem:[#allocation5 + $0x88] sm:$0xf]
    %v117 = vld [vmem:[#allocation5 + $0x94] sm:$0xf]
    %v118 = vld [vmem:[#allocation5 + $0xa0] sm:$0xf]
    %v119 = vld [vmem:[#allocation5 + $0xac] sm:$0xf]
    %v120 = vld [vmem:[#allocation5 + $0xb8] sm:$0xf]
    %v121 = vld [vmem:[#allocation7 + $0x1] sm:$0x1]
    %v123 = vperm.slane %v121, 0
    %v141 = vunpack.c.l.b16 %v105
    %v142 = vunpack.c.l.b16 %v106
    %v143 = vunpack.c.l.b16 %v107
    %v144 = vunpack.c.l.b16 %v108
    %v145 = vunpack.c.l.b16 %v109
    %v146 = vunpack.c.l.b16 %v110
    %v147 = vunpack.c.l.b16 %v111
    %v148 = vunpack.c.l.b16 %v112
    %v149 = vunpack.c.l.b16 %v113
    %v150 = vunpack.c.l.b16 %v114
    %v151 = vunpack.c.l.b16 %v115
    %v152 = vunpack.c.l.b16 %v116
    %v153 = vunpack.c.l.b16 %v117
    %v154 = vunpack.c.l.b16 %v118
    %v155 = vunpack.c.l.b16 %v119
    %v156 = vunpack.c.l.b16 %v120
    %v157 = vpack.c.b16 %v142, %v141
    %v158 = vpack.c.b16 %v144, %v143
    %v159 = vpack.c.b16 %v146, %v145
    %v160 = vpack.c.b16 %v148, %v147
    %v161 = vpack.c.b16 %v150, %v149
    %v162 = vpack.c.b16 %v152, %v151
    %v163 = vpack.c.b16 %v154, %v153
    %v164 = vpack.c.b16 %v156, %v155
    %173 = vmatpush.bf16.msra.mxu0 %v164
    %174 = vmatpush.bf16.msra.mxu0 %v163
    %175 = vmatpush.bf16.msra.mxu0 %v162
    %176 = vmatpush.bf16.msra.mxu0 %v161
    %177 = vmatpush.bf16.msra.mxu0 %v160
    %178 = vmatpush.bf16.msra.mxu0 %v159
    %179 = vmatpush.bf16.msra.mxu0 %v158
    %180 = vmatpush.bf16.msra.mxu0 %v157
    %181 = vmatmul.bf16.gmra.mxu0 %v104
    %v182 = vpop.f32.mrf.mxu0
    %v183 = vadd.f32 %v123, %v182
    %v184 = vpop.f32.mrf.mxu0
    %v185 = vadd.f32 %v123, %v184
    %186 = vdwg.mxu0
    %v187 = vmax.f32 %v183, 0.0
    %v188 = vmax.f32 %v185, 0.0
    %v189 = vpack.c.bf16 %v188, %v187
    %v190 = vld [vmem:[#allocation5 + $0x8] sm:$0xf]
    %v191 = vld [vmem:[#allocation5 + $0x14] sm:$0xf]
    %v192 = vld [vmem:[#allocation5 + $0x20] sm:$0xf]
    %v193 = vld [vmem:[#allocation5 + $0x2c] sm:$0xf]
    %v194 = vld [vmem:[#allocation5 + $0x38] sm:$0xf]
    %v195 = vld [vmem:[#allocation5 + $0x44] sm:$0xf]
    %v196 = vld [vmem:[#allocation5 + $0x50] sm:$0xf]
    %v197 = vld [vmem:[#allocation5 + $0x5c] sm:$0xf]
    %v198 = vld [vmem:[#allocation5 + $0x68] sm:$0xf]
    %v199 = vld [vmem:[#allocation5 + $0x74] sm:$0xf]
    %v200 = vld [vmem:[#allocation5 + $0x80] sm:$0xf]
    %v201 = vld [vmem:[#allocation5 + $0x8c] sm:$0xf]
    %v202 = vld [vmem:[#allocation5 + $0x98] sm:$0xf]
    %v203 = vld [vmem:[#allocation5 + $0xa4] sm:$0xf]
    %v204 = vld [vmem:[#allocation5 + $0xb0] sm:$0xf]
    %v205 = vld [vmem:[#allocation5 + $0xbc] sm:$0xf]
    %v206 = vld [vmem:[#allocation7 + $0x2] sm:$0x1]
    %v208 = vperm.slane %v206, 0
    %v226 = vunpack.c.l.b16 %v190
    %v227 = vunpack.c.l.b16 %v191
    %v228 = vunpack.c.l.b16 %v192
    %v229 = vunpack.c.l.b16 %v193
    %v230 = vunpack.c.l.b16 %v194
    %v231 = vunpack.c.l.b16 %v195
    %v232 = vunpack.c.l.b16 %v196
    %v233 = vunpack.c.l.b16 %v197
    %v234 = vunpack.c.l.b16 %v198
    %v235 = vunpack.c.l.b16 %v199
    %v236 = vunpack.c.l.b16 %v200
    %v237 = vunpack.c.l.b16 %v201
    %v238 = vunpack.c.l.b16 %v202
    %v239 = vunpack.c.l.b16 %v203
    %v240 = vunpack.c.l.b16 %v204
    %v241 = vunpack.c.l.b16 %v205
    %v242 = vpack.c.b16 %v227, %v226
    %v243 = vpack.c.b16 %v229, %v228
    %v244 = vpack.c.b16 %v231, %v230
    %v245 = vpack.c.b16 %v233, %v232
    %v246 = vpack.c.b16 %v235, %v234
    %v247 = vpack.c.b16 %v237, %v236
    %v248 = vpack.c.b16 %v239, %v238
    %v249 = vpack.c.b16 %v241, %v240
    %258 = vmatpush.bf16.msra.mxu0 %v249
    %259 = vmatpush.bf16.msra.mxu0 %v248
    %260 = vmatpush.bf16.msra.mxu0 %v247
    %261 = vmatpush.bf16.msra.mxu0 %v246
    %262 = vmatpush.bf16.msra.mxu0 %v245
    %263 = vmatpush.bf16.msra.mxu0 %v244
    %264 = vmatpush.bf16.msra.mxu0 %v243
    %265 = vmatpush.bf16.msra.mxu0 %v242
    %266 = vmatmul.bf16.gmra.mxu0 %v189
    %v267 = vpop.f32.mrf.mxu0
    %v268 = vadd.f32 %v208, %v267
    %v269 = vpop.f32.mrf.mxu0
    %v270 = vadd.f32 %v208, %v269
    %271 = vdwg.mxu0
    %v272 = vtanh.pop %v268
    %v273 = vtanh.pop %v270
    %274 = vst [vmem:[#allocation8] sm:$0xff] %v272
    %275 = vst [vmem:[#allocation8 + $0x8] sm:$0xff] %v273
    // Predicated region
    $region26: #{tpu_custom_call.1} parent=1 // pred_check
      _
    $region27: #{tpu_custom_call.1} parent=1 // pred_check_branch
      %277 = sbr.rel (0) target = $region29
    $region28: #{tpu_custom_call.1} parent=1 // pred_region
      %279 = vsyncadd [#allocation4], 0
      %s280 = sshll.u32 [#allocation8], 4
      %s281 = int_to_ptr.vmem [resolvable:$true] %s280
      %s282 = sshll.u32 %s3, 4
      %s283 = int_to_ptr.hbm [resolvable:$true] %s282
      %288 = dma.vmem_to_hbm [thread:$0]  %s281, 256, %s283, [#allocation4], 128, 128, 8
    $region29: #{tpu_custom_call.1} parent=1 // pred_fallthru
      _
    // Predicated region
    $region30: #{tpu_custom_call.1} parent=1 // pred_check
      _
    $region31: #{tpu_custom_call.1} parent=1 // pred_check_branch
      %290 = sbr.rel (0) target = $region33
    $region32: #{tpu_custom_call.1} parent=1 // pred_region
      %292 = dma.done [#allocation4], 256
    $region33: #{tpu_custom_call.1} parent=1 // pred_fallthru
      _
    %293 = vsyncpa [#allocation3], 1
    %294 = vsyncpa [#allocation6], 1
    %295 = vsyncpa [#allocation4], 1

</llo_original>
